<compile_context>
chip_gen: v7x
topology: tpu7x:2x2x1
jax: 0.10.0
libtpu: 0.0.40
codegen_flags: <defaults>
</compile_context>

<pallas_src>
import functools

import jax
import jax.numpy as jnp
from jax.experimental import pallas as pl
from jax.experimental.pallas import tpu as pltpu


def _mf_kernel(uv_ref, iv_ref, out_ref, *, y_range):
    # uv_ref/iv_ref: (blk, F_aug) gathered (and bias-augmented) rows.
    prod = uv_ref[...].astype(jnp.float32) * iv_ref[...].astype(jnp.float32)
    s = jnp.sum(prod, axis=1, keepdims=True)          # (blk, 1)
    if y_range is not None:
        lo, hi = y_range
        s = jax.nn.sigmoid(s) * (hi - lo) + lo
    out_ref[...] = s.astype(out_ref.dtype)


def _max_block_rows(f_aug, table_dtype, vmem_budget_bytes):
    """F-aware cap on batch rows per block (counts lane padding + out block)."""
    in_bytes = jnp.dtype(table_dtype).itemsize
    lanes_in = pl.cdiv(f_aug, 128) * 128          # minor dim pads to 128 lanes
    per_row = 2 * (2 * lanes_in * in_bytes)       # 2 inputs, double-buffered
    per_row += 2 * (128 * 4)                      # (blk,1) f32 out block, 2 bufs
    cap = vmem_budget_bytes // per_row
    return max(128, (cap // 128) * 128)


def _pick_block(b_pad, block_b, cap_rows):
    """Largest 128-multiple block <= caps dividing b_pad; prefer even #blocks."""
    cap = min(block_b, cap_rows, b_pad)
    cap = max(128, (cap // 128) * 128)
    divisors = [d for d in range(128, cap + 1, 128) if b_pad % d == 0]
    if not divisors:                               # b_pad is a multiple of 128
        divisors = [128]
    even = [d for d in divisors if (b_pad // d) % 2 == 0]
    pool = even or divisors
    return max(pool)


def matrix_factorization_forward(params, users, items, *, y_range=None,
                                 bias=True, block_b=8192,
                                 vmem_budget_bytes=24 * 1024 * 1024):
    """Pallas implementation of MatrixFactorization.forward."""
    uv_tbl = params["user_embedding"]
    iv_tbl = params["item_embedding"]
    n_u1, n_factors = uv_tbl.shape
    n_i1, _ = iv_tbl.shape
    B = users.shape[0]

    if bias:
        # Fold biases into the (tiny) tables as two extra factor columns.
        ub = params["user_biases"].astype(uv_tbl.dtype).reshape(n_u1, 1)
        ib = params["item_biases"].astype(iv_tbl.dtype).reshape(n_i1, 1)
        uv_tbl = jnp.concatenate(
            [uv_tbl, ub, jnp.ones((n_u1, 1), uv_tbl.dtype)], axis=1)
        iv_tbl = jnp.concatenate(
            [iv_tbl, jnp.ones((n_i1, 1), iv_tbl.dtype), ib], axis=1)
    f_aug = uv_tbl.shape[1]

    # Pad batch to a lane multiple; index 0 is a valid embedding row, so the
    # padded tail is harmless and gets sliced off at the end.
    b_pad = pl.cdiv(B, 128) * 128
    users_p = jnp.pad(users.astype(jnp.int32), (0, b_pad - B))
    items_p = jnp.pad(items.astype(jnp.int32), (0, b_pad - B))

    # One contiguous row-gather per side (XLA); NO transpose pass — the kernel
    # consumes this natural [b_pad, F_aug] layout directly.
    # Note: jnp.take clamps out-of-range ids (maps them to the last row)
    # instead of erroring like PyTorch.
    uv = jnp.take(uv_tbl, users_p, axis=0)
    iv = jnp.take(iv_tbl, items_p, axis=0)

    cap_rows = _max_block_rows(f_aug, uv.dtype, vmem_budget_bytes)
    blk = _pick_block(b_pad, block_b, cap_rows)
    grid = (b_pad // blk,)

    itemsize = jnp.dtype(uv.dtype).itemsize
    cost = pl.CostEstimate(
        flops=2 * b_pad * f_aug + (2 * b_pad if y_range is not None else 0),
        transcendentals=b_pad if y_range is not None else 0,
        bytes_accessed=2 * b_pad * f_aug * itemsize + b_pad * 4,
    )

    kern = functools.partial(_mf_kernel, y_range=y_range)
    out = pl.pallas_call(
        kern,
        out_shape=jax.ShapeDtypeStruct((b_pad, 1), jnp.float32),
        grid_spec=pl.GridSpec(
            grid=grid,
            in_specs=[
                pl.BlockSpec((blk, f_aug), lambda i: (i, 0)),
                pl.BlockSpec((blk, f_aug), lambda i: (i, 0)),
            ],
            out_specs=pl.BlockSpec((blk, 1), lambda i: (i, 0)),
        ),
        compiler_params=pltpu.CompilerParams(
            dimension_semantics=("parallel",),
            vmem_limit_bytes=32 * 1024 * 1024,
        ),
        cost_estimate=cost,
    )(uv, iv)

    return out[:B, 0]  # [B], matches torch .sum(1) + .squeeze()


def _reference(params, users, items, y_range, bias=True):
    uv = params["user_embedding"][users]
    iv = params["item_embedding"][items]
    out = (uv * iv).sum(1)
    if bias:
        out = out + (params["user_biases"][users]
                     + params["item_biases"][items]).squeeze()
    if y_range is None:
        return out
    return jax.nn.sigmoid(out) * (y_range[1] - y_range[0]) + y_range[0]


if __name__ == "__main__":
    key = jax.random.PRNGKey(0)
    n_users, n_items, n_factors = 10, 20, 32

    k1, k2, k3, k4, k5, k6 = jax.random.split(key, 6)
    # Deterministic init mirroring uniform_(-0.05, 0.05); tables have n+1 rows.
    params = {
        "user_embedding": jax.random.uniform(
            k1, (n_users + 1, n_factors), jnp.float32, -0.05, 0.05),
        "item_embedding": jax.random.uniform(
            k2, (n_items + 1, n_factors), jnp.float32, -0.05, 0.05),
        "user_biases": jax.random.uniform(
            k3, (n_users + 1, 1), jnp.float32, -0.05, 0.05),
        "item_biases": jax.random.uniform(
            k4, (n_items + 1, 1), jnp.float32, -0.05, 0.05),
    }

    # Small batch (exercises padding 8 -> 128, single block).
    B = 8
    users = jax.random.randint(k5, (B,), 0, n_users + 1)
    items = jax.random.randint(k6, (B,), 0, n_items + 1)

    out_plain = jax.block_until_ready(
        matrix_factorization_forward(params, users, items, y_range=None))
    out_ranged = jax.block_until_ready(
        matrix_factorization_forward(params, users, items, y_range=(0.0, 5.0)))
    out_nobias = jax.block_until_ready(
        matrix_factorization_forward(params, users, items, bias=False))

    assert out_plain.shape == (B,)
    assert jnp.allclose(out_plain, _reference(params, users, items, None), atol=1e-5)
    assert jnp.allclose(out_ranged, _reference(params, users, items, (0.0, 5.0)), atol=1e-5)
    assert jnp.allclose(out_nobias, _reference(params, users, items, None, bias=False), atol=1e-5)

    # Ragged batch that pads to 256 and splits into 2 parallel blocks
    # (even block count -> both v7x TensorCores get equal work).
    B2 = 250
    k7, k8 = jax.random.split(k5)
    users2 = jax.random.randint(k7, (B2,), 0, n_users + 1)
    items2 = jax.random.randint(k8, (B2,), 0, n_items + 1)
    out2 = jax.block_until_ready(
        matrix_factorization_forward(params, users2, items2, y_range=(0.0, 5.0)))
    assert out2.shape == (B2,)
    assert jnp.allclose(out2, _reference(params, users2, items2, (0.0, 5.0)), atol=1e-5)

    print("KERNEL_OK")
</pallas_src>

<mosaic_0001>
module attributes {stable_mosaic.version = 11 : i64} {
  func.func @_mf_kernel(%arg0: i32, %arg1: memref<128x34xf32, #tpu.memory_space<vmem>>, %arg2: memref<128x34xf32, #tpu.memory_space<vmem>>, %arg3: memref<128x1xf32, #tpu.memory_space<vmem>>) attributes {dimension_semantics = [#tpu.dimension_semantics<parallel>], iteration_bounds = array<i64: 1>, scalar_prefetch = 0 : i64, scratch_operands = 0 : i64, tpu.core_type = #tpu.core_type<tc>, window_params = [{transform_indices = @transform_0, window_bounds = array<i64: 128, 34>}, {transform_indices = @transform_1, window_bounds = array<i64: 128, 34>}, {transform_indices = @transform_2, window_bounds = array<i64: 128, 1>}]} {
    %c0 = arith.constant 0 : index
    %c0_0 = arith.constant 0 : index
    %0 = vector.load %arg1[%c0, %c0_0] : memref<128x34xf32, #tpu.memory_space<vmem>>, vector<128x34xf32>
    %c0_1 = arith.constant 0 : index
    %c0_2 = arith.constant 0 : index
    %1 = vector.load %arg2[%c0_1, %c0_2] : memref<128x34xf32, #tpu.memory_space<vmem>>, vector<128x34xf32>
    %2 = arith.mulf %0, %1 : vector<128x34xf32>
    %cst = arith.constant dense<0.000000e+00> : vector<128xf32>
    %3 = vector.multi_reduction <add>, %2, %cst [1] : vector<128x34xf32> to vector<128xf32>
    %4 = vector.shape_cast %3 : vector<128xf32> to vector<128x1xf32>
    %c0_3 = arith.constant 0 : index
    %c0_4 = arith.constant 0 : index
    %5 = vector.load %arg3[%c0_3, %c0_4] : memref<128x1xf32, #tpu.memory_space<vmem>>, vector<128x1xf32>
    tpu.vector_store %arg3[%c0_3, %c0_4], %4 {strides = array<i32>} : memref<128x1xf32, #tpu.memory_space<vmem>>, vector<128x1xf32>,
    return
  }
  func.func @transform_0(%arg0: i32) -> (i32, i32) {
    %c0_i32 = arith.constant 0 : i32
    %c0_i32_0 = arith.constant 0 : i32
    return %arg0, %c0_i32 : i32, i32
  }
  func.func @transform_1(%arg0: i32) -> (i32, i32) {
    %c0_i32 = arith.constant 0 : i32
    %c0_i32_0 = arith.constant 0 : i32
    return %arg0, %c0_i32 : i32, i32
  }
  func.func @transform_2(%arg0: i32) -> (i32, i32) {
    %c0_i32 = arith.constant 0 : i32
    %c0_i32_0 = arith.constant 0 : i32
    return %arg0, %c0_i32 : i32, i32
  }
}

</mosaic_0001>

<llo_original>
// kernel: tpu_custom_call.1
$region0: #{tpu_custom_call.1}
  #allocation0 [shape = 'u32[]', space=smem, size = 0x4, offset = 0x4, fixed_abs, tag = 'smem constant byte address 0x4 - core index']
  #allocation1 [shape = 'u32[144,128]{1,0:T(1,128)}', space=vmem, size = 0x12000, scoped, tag = 'internal scratch']
  %s0 = inlined_call_operand.vmem [shape: f32[128,34], index: 0, kind: input, shape index: {}]
  %s1 = inlined_call_operand.vmem [shape: f32[128,34], index: 1, kind: input, shape index: {}]
  %s2 = inlined_call_operand.vmem [shape: f32[128,1], index: 2, kind: output, shape index: {}]
  %s3 = sld [smem:[#allocation0]]
  $region18: #{tpu_custom_call.1} parent=0
    _
  %s5 = ssub.s32 1, %s3
  %s6 = scalar_select 0, %s5, %s3
  // Predicated region
  $region2: #{tpu_custom_call.1} parent=0 // pred_check
    _
  $region3: #{tpu_custom_call.1} parent=0 // pred_check_branch
    %8 = sbr.rel (0) target = $region5
  $region4: #{tpu_custom_call.1} parent=0 // pred_region
    _
  $region5: #{tpu_custom_call.1} parent=0 // pred_fallthru
    _
  // Predicated region
  $region6: #{tpu_custom_call.1} parent=0 // pred_check
    _
  $region7: #{tpu_custom_call.1} parent=0 // pred_check_branch
    %10 = sbr.rel (0) target = $region9
  $region8: #{tpu_custom_call.1} parent=0 // pred_region
    _
  $region9: #{tpu_custom_call.1} parent=0 // pred_fallthru
    _
  %v11 = vld [vmem:[%s0] sm:$0xff]
  %v12 = vld [vmem:[%s0 + $0x8] sm:$0xff]
  %v13 = vld [vmem:[%s0 + $0x10] sm:$0xff]
  %v14 = vld [vmem:[%s0 + $0x18] sm:$0xff]
  %v15 = vld [vmem:[%s0 + $0x20] sm:$0xff]
  %v16 = vld [vmem:[%s0 + $0x28] sm:$0xff]
  %v17 = vld [vmem:[%s0 + $0x30] sm:$0xff]
  %v18 = vld [vmem:[%s0 + $0x38] sm:$0xff]
  %v19 = vld [vmem:[%s0 + $0x40] sm:$0xff]
  %v20 = vld [vmem:[%s0 + $0x48] sm:$0xff]
  %v21 = vld [vmem:[%s0 + $0x50] sm:$0xff]
  %v22 = vld [vmem:[%s0 + $0x58] sm:$0xff]
  %v23 = vld [vmem:[%s0 + $0x60] sm:$0xff]
  %v24 = vld [vmem:[%s0 + $0x68] sm:$0xff]
  %v25 = vld [vmem:[%s0 + $0x70] sm:$0xff]
  %v26 = vld [vmem:[%s0 + $0x78] sm:$0xff]
  %v27 = vld [vmem:[%s1] sm:$0xff]
  %v28 = vld [vmem:[%s1 + $0x8] sm:$0xff]
  %v29 = vld [vmem:[%s1 + $0x10] sm:$0xff]
  %v30 = vld [vmem:[%s1 + $0x18] sm:$0xff]
  %v31 = vld [vmem:[%s1 + $0x20] sm:$0xff]
  %v32 = vld [vmem:[%s1 + $0x28] sm:$0xff]
  %v33 = vld [vmem:[%s1 + $0x30] sm:$0xff]
  %v34 = vld [vmem:[%s1 + $0x38] sm:$0xff]
  %v35 = vld [vmem:[%s1 + $0x40] sm:$0xff]
  %v36 = vld [vmem:[%s1 + $0x48] sm:$0xff]
  %v37 = vld [vmem:[%s1 + $0x50] sm:$0xff]
  %v38 = vld [vmem:[%s1 + $0x58] sm:$0xff]
  %v39 = vld [vmem:[%s1 + $0x60] sm:$0xff]
  %v40 = vld [vmem:[%s1 + $0x68] sm:$0xff]
  %v41 = vld [vmem:[%s1 + $0x70] sm:$0xff]
  %v42 = vld [vmem:[%s1 + $0x78] sm:$0xff]
  %v43 = vmul.f32 %v11, %v27
  %v44 = vmul.f32 %v12, %v28
  %v45 = vmul.f32 %v13, %v29
  %v46 = vmul.f32 %v14, %v30
  %v47 = vmul.f32 %v15, %v31
  %v48 = vmul.f32 %v16, %v32
  %v49 = vmul.f32 %v17, %v33
  %v50 = vmul.f32 %v18, %v34
  %v51 = vmul.f32 %v19, %v35
  %v52 = vmul.f32 %v20, %v36
  %v53 = vmul.f32 %v21, %v37
  %v54 = vmul.f32 %v22, %v38
  %v55 = vmul.f32 %v23, %v39
  %v56 = vmul.f32 %v24, %v40
  %v57 = vmul.f32 %v25, %v41
  %v58 = vmul.f32 %v26, %v42
  %vm59 = vcmask 277504
  %v60 = vsel %vm59, %v43, 0.0
  %61 = vadd.xlane.f32.xlu0 %v60
  %v62 = vpop.xlane.xlu0 %61
  %v63 = vsel %vm59, %v44, 0.0
  %64 = vadd.xlane.f32.xlu0 %v63
  %v65 = vpop.xlane.xlu0 %64
  %v66 = vsel %vm59, %v45, 0.0
  %67 = vadd.xlane.f32.xlu0 %v66
  %v68 = vpop.xlane.xlu0 %67
  %v69 = vsel %vm59, %v46, 0.0
  %70 = vadd.xlane.f32.xlu0 %v69
  %v71 = vpop.xlane.xlu0 %70
  %v72 = vsel %vm59, %v47, 0.0
  %73 = vadd.xlane.f32.xlu0 %v72
  %v74 = vpop.xlane.xlu0 %73
  %v75 = vsel %vm59, %v48, 0.0
  %76 = vadd.xlane.f32.xlu0 %v75
  %v77 = vpop.xlane.xlu0 %76
  %v78 = vsel %vm59, %v49, 0.0
  %79 = vadd.xlane.f32.xlu0 %v78
  %v80 = vpop.xlane.xlu0 %79
  %v81 = vsel %vm59, %v50, 0.0
  %82 = vadd.xlane.f32.xlu0 %v81
  %v83 = vpop.xlane.xlu0 %82
  %v84 = vsel %vm59, %v51, 0.0
  %85 = vadd.xlane.f32.xlu0 %v84
  %v86 = vpop.xlane.xlu0 %85
  %v87 = vsel %vm59, %v52, 0.0
  %88 = vadd.xlane.f32.xlu0 %v87
  %v89 = vpop.xlane.xlu0 %88
  %v90 = vsel %vm59, %v53, 0.0
  %91 = vadd.xlane.f32.xlu0 %v90
  %v92 = vpop.xlane.xlu0 %91
  %v93 = vsel %vm59, %v54, 0.0
  %94 = vadd.xlane.f32.xlu0 %v93
  %v95 = vpop.xlane.xlu0 %94
  %v96 = vsel %vm59, %v55, 0.0
  %97 = vadd.xlane.f32.xlu0 %v96
  %v98 = vpop.xlane.xlu0 %97
  %v99 = vsel %vm59, %v56, 0.0
  %100 = vadd.xlane.f32.xlu0 %v99
  %v101 = vpop.xlane.xlu0 %100
  %v102 = vsel %vm59, %v57, 0.0
  %103 = vadd.xlane.f32.xlu0 %v102
  %v104 = vpop.xlane.xlu0 %103
  %v105 = vsel %vm59, %v58, 0.0
  %106 = vadd.xlane.f32.xlu0 %v105
  %v107 = vpop.xlane.xlu0 %106
  %vm108 = vcmask 7168
  %109 = vst.msk [vmem:[%s2] sm:$0xff] %vm108, %v62
  %110 = vst.msk [vmem:[%s2 + $0x8] sm:$0xff] %vm108, %v65
  %111 = vst.msk [vmem:[%s2 + $0x10] sm:$0xff] %vm108, %v68
  %112 = vst.msk [vmem:[%s2 + $0x18] sm:$0xff] %vm108, %v71
  %113 = vst.msk [vmem:[%s2 + $0x20] sm:$0xff] %vm108, %v74
  %114 = vst.msk [vmem:[%s2 + $0x28] sm:$0xff] %vm108, %v77
  %115 = vst.msk [vmem:[%s2 + $0x30] sm:$0xff] %vm108, %v80
  %116 = vst.msk [vmem:[%s2 + $0x38] sm:$0xff] %vm108, %v83
  %117 = vst.msk [vmem:[%s2 + $0x40] sm:$0xff] %vm108, %v86
  %118 = vst.msk [vmem:[%s2 + $0x48] sm:$0xff] %vm108, %v89
  %119 = vst.msk [vmem:[%s2 + $0x50] sm:$0xff] %vm108, %v92
  %120 = vst.msk [vmem:[%s2 + $0x58] sm:$0xff] %vm108, %v95
  %121 = vst.msk [vmem:[%s2 + $0x60] sm:$0xff] %vm108, %v98
  %122 = vst.msk [vmem:[%s2 + $0x68] sm:$0xff] %vm108, %v101
  %123 = vst.msk [vmem:[%s2 + $0x70] sm:$0xff] %vm108, %v104
  %124 = vst.msk [vmem:[%s2 + $0x78] sm:$0xff] %vm108, %v107
  // Predicated region
  $region10: #{tpu_custom_call.1} parent=0 // pred_check
    _
  $region11: #{tpu_custom_call.1} parent=0 // pred_check_branch
    %126 = sbr.rel (0) target = $region13
  $region12: #{tpu_custom_call.1} parent=0 // pred_region
    _
  $region13: #{tpu_custom_call.1} parent=0 // pred_fallthru
    _
  // Predicated region
  $region14: #{tpu_custom_call.1} parent=0 // pred_check
    _
  $region15: #{tpu_custom_call.1} parent=0 // pred_check_branch
    %128 = sbr.rel (0) target = $region17
  $region16: #{tpu_custom_call.1} parent=0 // pred_region
    _
  $region17: #{tpu_custom_call.1} parent=0 // pred_fallthru
    _

</llo_original>
